<compile_context>
chip_gen: v7x
topology: tpu7x:2x2x1
jax: 0.10.0
libtpu: 0.0.40
codegen_flags: <defaults>
</compile_context>

<pallas_src>
import jax
import jax.numpy as jnp
from jax.experimental import pallas as pl
from jax.experimental.pallas import tpu as pltpu

_MAX_INFLIGHT_DMAS = 4            # cap on concurrently issued HBM->HBM DMAs
_TARGET_CHUNK_BYTES = 8 << 20     # aim for ~8 MiB per DMA chunk on large tensors


def _make_copy_kernel(chunks):
    """Kernel factory: copy `chunks` (static (start, size) ranges along axis 0)
    of the input HBM ref into the output HBM ref via async DMAs."""

    def kernel(x_hbm, o_hbm, sems):
        copies = []
        for idx, (start, size) in enumerate(chunks):
            cp = pltpu.make_async_copy(
                x_hbm.at[pl.ds(start, size)],
                o_hbm.at[pl.ds(start, size)],
                sems.at[idx],
            )
            cp.start()
            copies.append(cp)
        for cp in copies:
            cp.wait()

    return kernel


def _identity_pallas(
    x: jax.Array,
    *,
    target_chunk_bytes: int = _TARGET_CHUNK_BYTES,
    max_inflight: int = _MAX_INFLIGHT_DMAS,
) -> jax.Array:
    """Materialized identity copy of `x` via direct HBM->HBM DMAs (fresh buffer)."""
    if x.size == 0:
        return x
    if x.ndim == 0:
        # Copy scalars through a trivial (1,)-view; reshape of a scalar is free.
        return _identity_pallas(x.reshape(1)).reshape(())

    itemsize = jnp.dtype(x.dtype).itemsize
    total_bytes = x.size * itemsize
    dim0 = x.shape[0]

    # Chunk the leading axis into a few contiguous ranges so several DMAs are
    # in flight for big tensors; small tensors get one whole-array DMA.
    n_chunks = max(1, min(dim0, max_inflight, pl.cdiv(total_bytes, target_chunk_bytes)))
    base, rem = divmod(dim0, n_chunks)
    chunks, start = [], 0
    for c in range(n_chunks):
        size = base + (1 if c < rem else 0)
        chunks.append((start, size))
        start += size

    return pl.pallas_call(
        _make_copy_kernel(tuple(chunks)),
        out_shape=jax.ShapeDtypeStruct(x.shape, x.dtype),
        in_specs=[pl.BlockSpec(memory_space=pl.ANY)],
        out_specs=pl.BlockSpec(memory_space=pl.ANY),
        scratch_shapes=[pltpu.SemaphoreType.DMA((n_chunks,))],
        cost_estimate=pl.CostEstimate(
            flops=0, transcendentals=0, bytes_accessed=2 * total_bytes
        ),
    )(x)


def cutpoint_forward(*inputs, materialize_copy: bool = False):
    """JAX/Pallas equivalent of CutPoint.forward in its default state.

    After __init__, barrier_event / boundary_func / cp_func are all None, so
    the forward is identity: single input -> that input, multiple -> the tuple.
    The default path returns the inputs untouched (zero HBM traffic — the
    fastest possible "copy"); pass materialize_copy=True to force a fresh HBM
    buffer per input through the Pallas HBM->HBM DMA copy kernel.
    """
    # TODO(synk): the distributed paths (cp_func / send_fn / recv_fn pipeline
    # send-recv, barrier_event, boundary_func) are cross-stage communication /
    # profiling hooks with no single-device Pallas equivalent; only the
    # identity (un-partitioned) path is implemented.
    if materialize_copy:
        outs = tuple(_identity_pallas(x) for x in inputs)
    else:
        outs = tuple(inputs)
    if len(outs) == 1:
        return outs[0]
    return outs


if __name__ == "__main__":
    key = jax.random.PRNGKey(0)
    k0, k1, k2, k3 = jax.random.split(key, 4)

    # Small conv-style activation, NCHW layout as PyTorch would produce.
    x = jax.random.normal(k0, (2, 4, 16, 16), dtype=jnp.float32)

    # Default CutPoint path: pure pass-through, no kernel / no HBM traffic.
    y = cutpoint_forward(x)
    jax.block_until_ready(y)
    assert y.shape == x.shape and y.dtype == x.dtype
    assert bool(jnp.all(y == x))

    # Materialized-copy path: exercises the HBM->HBM DMA copy kernel
    # (fresh output buffer, no aliasing).
    y_copy = cutpoint_forward(x, materialize_copy=True)
    jax.block_until_ready(y_copy)
    assert y_copy.shape == x.shape and y_copy.dtype == x.dtype
    assert bool(jnp.all(y_copy == x))

    # Multi-input path (returns a tuple, like the module), mixed dtypes.
    x2 = jax.random.normal(k1, (2, 16, 64), dtype=jnp.bfloat16)
    y1, y2 = cutpoint_forward(x, x2, materialize_copy=True)
    jax.block_until_ready((y1, y2))
    assert bool(jnp.all(y1 == x)) and bool(jnp.all(y2 == x2))

    # Multi-chunk DMA path (small chunk target forces 2 in-flight DMAs) and an
    # odd, non-multiple-of-128 shape (no padding / lane constraints needed).
    x3 = jax.random.normal(k2, (2, 3, 100, 128), dtype=jnp.float32)   # 300 KiB
    y3 = _identity_pallas(x3, target_chunk_bytes=64 * 1024)           # -> 2 chunks
    x4 = jax.random.normal(k3, (3, 5, 7), dtype=jnp.float32)          # 105 elems
    y4 = _identity_pallas(x4)
    jax.block_until_ready((y3, y4))
    assert y3.shape == x3.shape and y4.shape == x4.shape
    assert bool(jnp.all(y3 == x3)) and bool(jnp.all(y4 == x4))

    print("KERNEL_OK")
</pallas_src>

<mosaic_0001>
module attributes {stable_mosaic.version = 11 : i64} {
  func.func @kernel(%arg0: memref<2x4x16x16xf32, #tpu.memory_space<any>>, %arg1: memref<2x4x16x16xf32, #tpu.memory_space<any>>, %arg2: memref<1x!tpu.dma_semaphore, #tpu.memory_space<semaphore_mem>>) attributes {dimension_semantics = [], scalar_prefetch = 0 : i64, scratch_operands = 1 : i64, tpu.core_type = #tpu.core_type<tc>} {
    %c0_i32 = arith.constant 0 : i32
    %c0_i32_0 = arith.constant 0 : i32
    %c0_i32_1 = arith.constant 0 : i32
    %c0_i32_2 = arith.constant 0 : i32
    %c0_i32_3 = arith.constant 0 : i32
    %0 = tpu.memref_slice %arg0[%c0_i32_0, %c0_i32_1, %c0_i32_2, %c0_i32_3] : memref<2x4x16x16xf32, #tpu.memory_space<any>> -> memref<2x4x16x16xf32, #tpu.memory_space<any>>
    %c0_i32_4 = arith.constant 0 : i32
    %c0_i32_5 = arith.constant 0 : i32
    %c0_i32_6 = arith.constant 0 : i32
    %c0_i32_7 = arith.constant 0 : i32
    %1 = tpu.memref_slice %arg1[%c0_i32_4, %c0_i32_5, %c0_i32_6, %c0_i32_7] : memref<2x4x16x16xf32, #tpu.memory_space<any>> -> memref<2x4x16x16xf32, #tpu.memory_space<any>>
    %2 = tpu.memref_slice %arg2[%c0_i32] : memref<1x!tpu.dma_semaphore, #tpu.memory_space<semaphore_mem>> -> memref<1x!tpu.dma_semaphore, #tpu.memory_space<semaphore_mem>>
    %3 = tpu.memref_squeeze %2 : memref<1x!tpu.dma_semaphore, #tpu.memory_space<semaphore_mem>> -> memref<!tpu.dma_semaphore, #tpu.memory_space<semaphore_mem>>
    tpu.enqueue_dma source(%0 : memref<2x4x16x16xf32, #tpu.memory_space<any>>) target(%1 : memref<2x4x16x16xf32, #tpu.memory_space<any>>) target_semaphore(%3 : memref<!tpu.dma_semaphore, #tpu.memory_space<semaphore_mem>>)
    %c0_i32_8 = arith.constant 0 : i32
    %c0_i32_9 = arith.constant 0 : i32
    %c0_i32_10 = arith.constant 0 : i32
    %c0_i32_11 = arith.constant 0 : i32
    %c0_i32_12 = arith.constant 0 : i32
    %4 = tpu.memref_slice %arg0[%c0_i32_9, %c0_i32_10, %c0_i32_11, %c0_i32_12] : memref<2x4x16x16xf32, #tpu.memory_space<any>> -> memref<2x4x16x16xf32, #tpu.memory_space<any>>
    %c0_i32_13 = arith.constant 0 : i32
    %c0_i32_14 = arith.constant 0 : i32
    %c0_i32_15 = arith.constant 0 : i32
    %c0_i32_16 = arith.constant 0 : i32
    %5 = tpu.memref_slice %arg1[%c0_i32_13, %c0_i32_14, %c0_i32_15, %c0_i32_16] : memref<2x4x16x16xf32, #tpu.memory_space<any>> -> memref<2x4x16x16xf32, #tpu.memory_space<any>>
    %6 = tpu.memref_slice %arg2[%c0_i32_8] : memref<1x!tpu.dma_semaphore, #tpu.memory_space<semaphore_mem>> -> memref<1x!tpu.dma_semaphore, #tpu.memory_space<semaphore_mem>>
    %7 = tpu.memref_squeeze %6 : memref<1x!tpu.dma_semaphore, #tpu.memory_space<semaphore_mem>> -> memref<!tpu.dma_semaphore, #tpu.memory_space<semaphore_mem>>
    tpu.wait_dma2 semaphore(%7 : memref<!tpu.dma_semaphore, #tpu.memory_space<semaphore_mem>>) src(%4 : memref<2x4x16x16xf32, #tpu.memory_space<any>>) dst(%5 : memref<2x4x16x16xf32, #tpu.memory_space<any>>)
    return
  }
}

</mosaic_0001>

<llo_original>
// kernel: tpu_custom_call.1
$region0: #{tpu_custom_call.1}
  #allocation0 [shape = 'u32[]', space=smem, size = 0x4, offset = 0x4, fixed_abs, tag = 'smem constant byte address 0x4 - core index']
  #allocation1 [shape = 'u32[144,128]{1,0:T(1,128)}', space=vmem, size = 0x12000, scoped, tag = 'internal scratch']
  #allocation2 [shape = 's32[1]{0}', space=sflag, size = 0x4, scoped, tag = 'scratch operand']
  #allocation3 [shape = 's32[]', space=sflag, size = 0x4, offset = 0, fixed_abs, tag = 'sflag constant byte address 0x0 - dummy sync flag']
  #allocation4 [shape = 'u32[0]{0}', space=smem, size = 0, offset = 0, fixed_abs, tag = 'smem constant byte address 0x0 - null']
  %s0 = inlined_call_operand.hbm [shape: f32[2,4,16,16], index: 0, kind: input, shape index: {}]
  %s1 = inlined_call_operand.hbm [shape: f32[2,4,16,16], index: 1, kind: output, shape index: {}]
  %s2 = sld [smem:[#allocation0]]
  $region2: #{tpu_custom_call.1} parent=0
    _
  %s4 = ssub.s32 1, %s2
  %s5 = scalar_select 0, %s4, %s2
  %s7 = sshll.u32 1, 14
  %s8 = sxor.u32 4294967295, %s7
  %s11 = sshll.u32 3, 24
  %s12 = sxor.u32 4294967295, %s11
  %s13 = sand.u32 0, %s12
  %s15 = sor.u32 %s13, 0
  %18 = dma.general %s0, 2048, %s1, [#allocation2], [#allocation3], [#allocation4], %s15, 0
  %s19 = smul.u32 2, 4
  %s20 = smul.u32 %s19, 16
  %s21 = smul.u32 %s20, 1
  %s22 = sshll.u32 %s21, 4
  %23 = dma.done [#allocation2], %s22
  %24 = vsyncmov [#allocation2]
  %s25 = vpop.sfrf %24
  %p26 = scmp.eq.s32.totalorder %s25, 0
  %p27 = pneg %p26
  %29 = shalt.err (%p27)

</llo_original>
